<compile_context>
chip_gen: v7x
topology: tpu7x:2x2x1
jax: 0.10.0
libtpu: 0.0.40
codegen_flags: <defaults>
</compile_context>

<pallas_src>
import functools

import jax
import jax.numpy as jnp
from jax.experimental import pallas as pl
from jax.experimental.pallas import tpu as pltpu


def upsample_conv_kernel(halo_ref, x_ref, w_ref, b_ref, even_ref, odd_ref, *,
                         channels, tile_len):
    C, TL = channels, tile_len
    w = w_ref[...]                                     # (4C, C) compute dtype
    x = x_ref[0].astype(w.dtype)                       # (C, TL)

    # One fused MXU matmul (f32 accumulation): rows are [W0, W1+W2, W0+W1, W2].
    p = jnp.dot(w, x, preferred_element_type=jnp.float32)          # (4C, TL)

    # Halo contributions from the two boundary columns of the neighbouring tiles
    # (zeros at the global sequence edges -> matches Conv1d padding=1).
    hp = jnp.dot(w, halo_ref[0, 0].astype(w.dtype),
                 preferred_element_type=jnp.float32)               # (4C, 2)
    e_left = hp[0 * C:1 * C, 0:1]       # W0 @ x[:, t*TL - 1]
    o_right = hp[3 * C:4 * C, 1:2]      # W2 @ x[:, (t+1)*TL]

    p0 = p[0 * C:1 * C]                 # W0      @ x_tile
    p12 = p[1 * C:2 * C]                # (W1+W2) @ x_tile
    p01 = p[2 * C:3 * C]                # (W0+W1) @ x_tile
    p2 = p[3 * C:4 * C]                 # W2      @ x_tile

    bias = b_ref[...]                                               # (C, 1) f32

    # even[:, i] = p0[:, i-1] + p12[:, i] + b   (i-1 supplied by left halo at i=0)
    even = jnp.concatenate([e_left, p0[:, :TL - 1]], axis=1) + p12 + bias
    # odd[:, i]  = p01[:, i] + p2[:, i+1] + b   (i+1 supplied by right halo at i=TL-1)
    odd = p01 + jnp.concatenate([p2[:, 1:], o_right], axis=1) + bias

    even_ref[0] = even.astype(even_ref.dtype)
    odd_ref[0] = odd.astype(odd_ref.dtype)


def _pick_tile(length, channels, vmem_budget_bytes, cap=512):
    """Largest L-tile (multiple of 128, dividing L) within the per-step VMEM budget."""
    # ~40 B per (channel, position): x tile + f32 (4C,TL) intermediate + 2 output tiles,
    # double-buffered.  Cap at 512 to bound the vreg/VMEM live range of the intermediate.
    budget_tl = vmem_budget_bytes // max(1, 40 * channels)
    cap = max(128, min(cap, (budget_tl // 128) * 128))
    if length <= cap:
        return length
    for tl in range(cap, 127, -128):
        if length % tl == 0:
            return tl
    # TODO(synk): pad L to a multiple of 128 instead of falling back to one full-length tile.
    return length


def upsample(x, weight, bias, *, compute_dtype=jnp.float32, out_dtype=None, max_tile=512):
    """x: (B, C, L) f32.  weight: (C, C, 3) Conv1d weight (OIK).  bias: (C,)."""
    B, C, L = x.shape
    out_dtype = x.dtype if out_dtype is None else out_dtype

    w0, w1, w2 = weight[:, :, 0], weight[:, :, 1], weight[:, :, 2]
    # Phase-combined fused weights.  f32 by default (HBM-bound kernel -> parity is free);
    # pass compute_dtype=jnp.bfloat16 for large-C / MXU-bound shapes.
    w_stack = jnp.concatenate([w0, w1 + w2, w0 + w1, w2], axis=0).astype(compute_dtype)
    b_col = bias.reshape(C, 1).astype(jnp.float32)

    # Per-generation VMEM: v7x has 64 MiB physical per TensorCore, v5e/v6e have 128 MiB.
    try:
        info = pltpu.get_tpu_info()
        vmem_phys = getattr(info, "vmem_capacity_bytes", None) or (64 << 20)
    except Exception:
        vmem_phys = 64 << 20                      # conservative (v7x) default
    vmem_limit = min((vmem_phys * 3) // 4, 64 << 20)

    TL = _pick_tile(L, C, vmem_phys // 4, cap=max_tile)
    NT = L // TL if L % TL == 0 else 1
    if L % TL != 0:
        TL = L

    # Boundary x columns per tile: halo[b, t, :, 0] = x[b, :, t*TL-1] (0 at t=0),
    #                              halo[b, t, :, 1] = x[b, :, (t+1)*TL] (0 at t=NT-1).
    xp = jnp.pad(x, ((0, 0), (0, 0), (1, 1)))
    left = xp[:, :, 0:L:TL].transpose(0, 2, 1)             # (B, NT, C)
    right = xp[:, :, TL + 1:L + 2:TL].transpose(0, 2, 1)   # (B, NT, C)
    halo = jnp.stack([left, right], axis=-1)               # (B, NT, C, 2)

    itemsize_out = jnp.dtype(out_dtype).itemsize
    cost = pl.CostEstimate(
        flops=2 * B * (4 * C) * C * (L + 2 * NT),
        transcendentals=0,
        bytes_accessed=4 * B * C * L + 2 * itemsize_out * B * C * L + 4 * (4 * C) * C + 4 * C,
    )

    even, odd = pl.pallas_call(
        functools.partial(upsample_conv_kernel, channels=C, tile_len=TL),
        out_shape=(jax.ShapeDtypeStruct((B, C, L), out_dtype),
                   jax.ShapeDtypeStruct((B, C, L), out_dtype)),
        grid_spec=pltpu.PrefetchScalarGridSpec(
            num_scalar_prefetch=0,
            grid=(B, NT),
            in_specs=[
                pl.BlockSpec((1, 1, C, 2), lambda b, t: (b, t, 0, 0)),   # halo columns
                pl.BlockSpec((1, C, TL), lambda b, t: (b, 0, t)),        # x tile
                pl.BlockSpec((4 * C, C), lambda b, t: (0, 0)),           # fused weights
                pl.BlockSpec((C, 1), lambda b, t: (0, 0)),               # bias
            ],
            out_specs=[
                pl.BlockSpec((1, C, TL), lambda b, t: (b, 0, t)),        # even phase
                pl.BlockSpec((1, C, TL), lambda b, t: (b, 0, t)),        # odd phase
            ],
        ),
        compiler_params=pltpu.CompilerParams(
            dimension_semantics=("parallel", "parallel"),
            vmem_limit_bytes=int(vmem_limit),
        ),
        cost_estimate=cost,
    )(halo, x, w_stack, b_col)

    # Lane interleave of the two phase slabs -> (B, C, 2L).  Fused XLA copy; see module
    # TODO(synk) for why this is not done inside the kernel.
    return jnp.stack([even, odd], axis=-1).reshape(B, C, 2 * L)


def init_params(key, channels, kernel_size=3):
    """Deterministic params matching nn.Conv1d(channels, channels, 3, padding=1) init."""
    kw, kb = jax.random.split(key)
    bound = 1.0 / (channels * kernel_size) ** 0.5
    weight = jax.random.uniform(kw, (channels, channels, kernel_size),
                                jnp.float32, -bound, bound)
    bias = jax.random.uniform(kb, (channels,), jnp.float32, -bound, bound)
    return weight, bias


def upsample_ref(x, weight, bias):
    """Pure-JAX reference mirroring the PyTorch forward (f32 end-to-end)."""
    y = jnp.repeat(x, 2, axis=-1)                       # nearest, scale_factor=2.0
    out = jax.lax.conv_general_dilated(
        y, weight, window_strides=(1,), padding=((1, 1),),
        dimension_numbers=("NCH", "OIH", "NCH"))
    return out + bias[None, :, None]


if __name__ == "__main__":
    B, C, L = 2, 32, 128
    key = jax.random.PRNGKey(0)
    kx, kp = jax.random.split(key)
    x = jax.random.normal(kx, (B, C, L), jnp.float32)
    weight, bias = init_params(kp, C)

    out = jax.jit(upsample)(x, weight, bias)
    jax.block_until_ready(out)

    ref = upsample_ref(x, weight, bias)
    assert out.shape == (B, C, 2 * L)
    max_err = float(jnp.max(jnp.abs(out - ref)))
    assert jnp.allclose(out, ref, atol=1e-2, rtol=1e-2), max_err
    print("KERNEL_OK")
</pallas_src>

<mosaic_0001>
module attributes {stable_mosaic.version = 11 : i64} {
  func.func @upsample_conv_kernel(%arg0: i32, %arg1: i32, %arg2: memref<1x1x32x2xf32, #tpu.memory_space<vmem>>, %arg3: memref<1x32x128xf32, #tpu.memory_space<vmem>>, %arg4: memref<128x32xf32, #tpu.memory_space<vmem>>, %arg5: memref<32x1xf32, #tpu.memory_space<vmem>>, %arg6: memref<1x32x128xf32, #tpu.memory_space<vmem>>, %arg7: memref<1x32x128xf32, #tpu.memory_space<vmem>>) attributes {dimension_semantics = [#tpu.dimension_semantics<parallel>, #tpu.dimension_semantics<parallel>], iteration_bounds = array<i64: 2, 1>, scalar_prefetch = 0 : i64, scratch_operands = 0 : i64, tpu.core_type = #tpu.core_type<tc>, window_params = [{transform_indices = @transform_0, window_bounds = array<i64: 1, 1, 32, 2>}, {transform_indices = @transform_1, window_bounds = array<i64: 1, 32, 128>}, {pipeline_mode = #tpu.pipeline_mode<synchronous>, transform_indices = @transform_2, window_bounds = array<i64: 128, 32>}, {pipeline_mode = #tpu.pipeline_mode<synchronous>, transform_indices = @transform_3, window_bounds = array<i64: 32, 1>}, {transform_indices = @transform_4, window_bounds = array<i64: 1, 32, 128>}, {transform_indices = @transform_5, window_bounds = array<i64: 1, 32, 128>}]} {
    %c0 = arith.constant 0 : index
    %c0_0 = arith.constant 0 : index
    %0 = vector.load %arg4[%c0, %c0_0] : memref<128x32xf32, #tpu.memory_space<vmem>>, vector<128x32xf32>
    %c0_1 = arith.constant 0 : index
    %c0_2 = arith.constant 0 : index
    %c0_3 = arith.constant 0 : index
    %1 = vector.load %arg3[%c0_1, %c0_2, %c0_3] : memref<1x32x128xf32, #tpu.memory_space<vmem>>, vector<1x32x128xf32>
    %2 = vector.shape_cast %1 : vector<1x32x128xf32> to vector<32x128xf32>
    %cst = arith.constant dense<0.000000e+00> : vector<128x128xf32>
    %3 = tpu.matmul %0, %2, %cst {dimension_numbers = #tpu.dot_dimension_numbers<[1], [0], [0], [1], [0, 0, 1, 1], [], []>} : vector<128x32xf32>, vector<32x128xf32>, vector<128x128xf32> -> vector<128x128xf32>
    %c0_4 = arith.constant 0 : index
    %c0_5 = arith.constant 0 : index
    %c0_6 = arith.constant 0 : index
    %c0_7 = arith.constant 0 : index
    %4 = vector.load %arg2[%c0_4, %c0_5, %c0_6, %c0_7] : memref<1x1x32x2xf32, #tpu.memory_space<vmem>>, vector<1x1x32x2xf32>
    %5 = vector.shape_cast %4 : vector<1x1x32x2xf32> to vector<32x2xf32>
    %cst_8 = arith.constant dense<0.000000e+00> : vector<128x2xf32>
    %6 = tpu.matmul %0, %5, %cst_8 {dimension_numbers = #tpu.dot_dimension_numbers<[1], [0], [0], [1], [0, 0, 1, 1], [], []>} : vector<128x32xf32>, vector<32x2xf32>, vector<128x2xf32> -> vector<128x2xf32>
    %7 = vector.extract_strided_slice %6 {offsets = [0, 0], sizes = [32, 1], strides = [1, 1]} : vector<128x2xf32> to vector<32x1xf32>
    %8 = vector.extract_strided_slice %6 {offsets = [96, 1], sizes = [32, 1], strides = [1, 1]} : vector<128x2xf32> to vector<32x1xf32>
    %9 = vector.extract_strided_slice %3 {offsets = [0, 0], sizes = [32, 128], strides = [1, 1]} : vector<128x128xf32> to vector<32x128xf32>
    %10 = vector.extract_strided_slice %3 {offsets = [32, 0], sizes = [32, 128], strides = [1, 1]} : vector<128x128xf32> to vector<32x128xf32>
    %11 = vector.extract_strided_slice %3 {offsets = [64, 0], sizes = [32, 128], strides = [1, 1]} : vector<128x128xf32> to vector<32x128xf32>
    %12 = vector.extract_strided_slice %3 {offsets = [96, 0], sizes = [32, 128], strides = [1, 1]} : vector<128x128xf32> to vector<32x128xf32>
    %c0_9 = arith.constant 0 : index
    %c0_10 = arith.constant 0 : index
    %13 = vector.load %arg5[%c0_9, %c0_10] : memref<32x1xf32, #tpu.memory_space<vmem>>, vector<32x1xf32>
    %14 = vector.extract_strided_slice %9 {offsets = [0, 0], sizes = [32, 127], strides = [1, 1]} : vector<32x128xf32> to vector<32x127xf32>
    %15 = tpu.concatenate %7, %14 in 1 : vector<32x1xf32>, vector<32x127xf32> -> vector<32x128xf32>
    %16 = arith.addf %15, %10 : vector<32x128xf32>
    %17 = vector.broadcast %13 : vector<32x1xf32> to vector<32x128xf32>
    %18 = arith.addf %16, %17 : vector<32x128xf32>
    %19 = vector.extract_strided_slice %12 {offsets = [0, 1], sizes = [32, 127], strides = [1, 1]} : vector<32x128xf32> to vector<32x127xf32>
    %20 = tpu.concatenate %19, %8 in 1 : vector<32x127xf32>, vector<32x1xf32> -> vector<32x128xf32>
    %21 = arith.addf %11, %20 : vector<32x128xf32>
    %22 = vector.broadcast %13 : vector<32x1xf32> to vector<32x128xf32>
    %23 = arith.addf %21, %22 : vector<32x128xf32>
    %c0_11 = arith.constant 0 : index
    %c0_12 = arith.constant 0 : index
    %c0_13 = arith.constant 0 : index
    %24 = vector.load %arg6[%c0_11, %c0_12, %c0_13] : memref<1x32x128xf32, #tpu.memory_space<vmem>>, vector<1x32x128xf32>
    %25 = vector.shape_cast %24 : vector<1x32x128xf32> to vector<32x128xf32>
    %26 = vector.shape_cast %18 : vector<32x128xf32> to vector<1x32x128xf32>
    tpu.vector_store %arg6[%c0_11, %c0_12, %c0_13], %26 {strides = array<i32>} : memref<1x32x128xf32, #tpu.memory_space<vmem>>, vector<1x32x128xf32>,
    %c0_14 = arith.constant 0 : index
    %c0_15 = arith.constant 0 : index
    %c0_16 = arith.constant 0 : index
    %27 = vector.load %arg7[%c0_14, %c0_15, %c0_16] : memref<1x32x128xf32, #tpu.memory_space<vmem>>, vector<1x32x128xf32>
    %28 = vector.shape_cast %27 : vector<1x32x128xf32> to vector<32x128xf32>
    %29 = vector.shape_cast %23 : vector<32x128xf32> to vector<1x32x128xf32>
    tpu.vector_store %arg7[%c0_14, %c0_15, %c0_16], %29 {strides = array<i32>} : memref<1x32x128xf32, #tpu.memory_space<vmem>>, vector<1x32x128xf32>,
    return
  }
  func.func @transform_0(%arg0: i32, %arg1: i32) -> (i32, i32, i32, i32) {
    %c0_i32 = arith.constant 0 : i32
    %c0_i32_0 = arith.constant 0 : i32
    %c0_i32_1 = arith.constant 0 : i32
    return %arg0, %arg1, %c0_i32, %c0_i32_0 : i32, i32, i32, i32
  }
  func.func @transform_1(%arg0: i32, %arg1: i32) -> (i32, i32, i32) {
    %c0_i32 = arith.constant 0 : i32
    %c0_i32_0 = arith.constant 0 : i32
    return %arg0, %c0_i32, %arg1 : i32, i32, i32
  }
  func.func @transform_2(%arg0: i32, %arg1: i32) -> (i32, i32) {
    %c0_i32 = arith.constant 0 : i32
    %c0_i32_0 = arith.constant 0 : i32
    %c0_i32_1 = arith.constant 0 : i32
    return %c0_i32, %c0_i32_0 : i32, i32
  }
  func.func @transform_3(%arg0: i32, %arg1: i32) -> (i32, i32) {
    %c0_i32 = arith.constant 0 : i32
    %c0_i32_0 = arith.constant 0 : i32
    %c0_i32_1 = arith.constant 0 : i32
    return %c0_i32, %c0_i32_0 : i32, i32
  }
  func.func @transform_4(%arg0: i32, %arg1: i32) -> (i32, i32, i32) {
    %c0_i32 = arith.constant 0 : i32
    %c0_i32_0 = arith.constant 0 : i32
    return %arg0, %c0_i32, %arg1 : i32, i32, i32
  }
  func.func @transform_5(%arg0: i32, %arg1: i32) -> (i32, i32, i32) {
    %c0_i32 = arith.constant 0 : i32
    %c0_i32_0 = arith.constant 0 : i32
    return %arg0, %c0_i32, %arg1 : i32, i32, i32
  }
}

</mosaic_0001>

<llo_original>
// kernel: upsample.1
$region0: #{upsample.1}
  #allocation0 [shape = 'u32[]', space=smem, size = 0x4, offset = 0x4, fixed_abs, tag = 'smem constant byte address 0x4 - core index']
  #allocation1 [shape = 'u32[144,128]{1,0:T(1,128)}', space=vmem, size = 0x12000, scoped, tag = 'internal scratch']
  %s0 = inlined_call_operand.vmem [shape: f32[2,1,32,2], index: 0, kind: input, shape index: {}]
  %s1 = inlined_call_operand.vmem [shape: f32[2,32,128], index: 1, kind: input, shape index: {}]
  %s2 = inlined_call_operand.vmem [shape: f32[128,32], index: 2, kind: input, shape index: {}]
  %s3 = inlined_call_operand.vmem [shape: f32[32,1], index: 3, kind: input, shape index: {}]
  %s4 = inlined_call_operand.vmem [shape: f32[2,32,128], index: 4, kind: output, shape index: {0}]
  %s5 = inlined_call_operand.vmem [shape: f32[2,32,128], index: 5, kind: output, shape index: {1}]
  %6 = xla_tuple %s4, %s5
  %s7 = sld [smem:[#allocation0]]
  $region57: #{upsample.1} parent=0
    _
  %s9 = ssub.s32 1, %s7
  %s10 = scalar_select 0, %s9, %s7
  loop: start=0, step=1, limit=4
  $region2: #{upsample.1} parent=0 // loop_pre_header
    _
  $region3: #{upsample.1} parent=0 // loop_header
    %s12 = sphi 0, %s16
    %p13 = scmp.ge.s32.totalorder %s12, 4
    %s19 = sphi 0, %s31
    %s20 = sphi 0, %s27
    %s21 = sphi 0, %s19
    %s22 = sphi 0, %s20
    %s23 = sphi 0, %s21
    %s24 = sphi 0, %s22
    %s36 = sphi 0, %s38
    %s39 = sphi 0, %s36
    %s40 = sphi 0, %s39
    %s56 = sphi 0, %s40
    %s64 = sphi 0, %s66
    %s67 = sphi 0, %s64
    %s68 = sphi 0, %s67
    %s84 = sphi 0, %s68
    %s88 = sphi 0, %s88
    %s90 = sphi 0, %s88
    %s91 = sphi 0, %s90
    %s105 = sphi 0, %s91
    %s109 = sphi 0, %s109
    %s111 = sphi 0, %s109
    %s112 = sphi 0, %s111
    %s126 = sphi 0, %s112
    %s134 = sphi 0, %s136
    %s137 = sphi 0, %s134
    %s138 = sphi 0, %s137
    %s154 = sphi 0, %s138
    %s162 = sphi 0, %s164
    %s165 = sphi 0, %s162
    %s166 = sphi 0, %s165
    %s182 = sphi 0, %s166
  $region4: #{upsample.1} parent=0 // loop_header_branch
    %15 = sbr.rel (%p13) target = $region8
  $region5: #{upsample.1} parent=0 // loop_body
    %s17 = ssub.s32 %s12, 1
    %s18 = ssub.s32 %s12, 2
    %s25 = sadd.s32 1, %s20
    %p26 = scmp.ge.s32.totalorder %s25, 1
    %s27 = scalar_select %p26, 0, %s25
    %s28 = sadd.s32 1, %s19
    %s29 = scalar_select %p26, %s28, %s19
    %p30 = scmp.ge.s32.totalorder %s29, 2
    %s31 = scalar_select %p30, 0, %s29
    %s32 = ssub.s32 %s19, %s31
    %s33 = ssub.s32 %s20, %s27
    %s34 = sor.u32 %s32, %s33
    %p35 = scmp.eq.s32.totalorder %s34, 0
    %s37 = sadd.s32 %s36, 1
    %s38 = scalar_select %p35, %s36, %s37
    %p41 = pneg %p35
    %p42 = scmp.eq.s32.totalorder %s12, 1
    %p43 = por %p41, %p42
    %p44 = scmp.ne.s32.totalorder %s36, %s39
    %p45 = scmp.eq.s32.totalorder %s12, 0
    %p46 = por %p44, %p45
    %p47 = scmp.ne.s32.totalorder %s36, %s39
    %p48 = scmp.eq.s32.totalorder %s17, 1
    %p49 = por %p47, %p48
    %p50 = scmp.ne.s32.totalorder %s39, %s40
    %p51 = scmp.eq.s32.totalorder %s17, 0
    %p52 = por %p50, %p51
    %p53 = scmp.ne.s32.totalorder %s39, %s40
    %p54 = scmp.eq.s32.totalorder %s18, 1
    %p55 = por %p53, %p54
    %p57 = scmp.ne.s32.totalorder %s40, %s56
    %p58 = scmp.eq.s32.totalorder %s18, 0
    %p59 = por %p57, %p58
    %s60 = ssub.s32 %s19, %s31
    %s61 = ssub.s32 %s20, %s27
    %s62 = sor.u32 %s60, %s61
    %p63 = scmp.eq.s32.totalorder %s62, 0
    %s65 = sadd.s32 %s64, 1
    %s66 = scalar_select %p63, %s64, %s65
    %p69 = pneg %p63
    %p70 = scmp.eq.s32.totalorder %s12, 1
    %p71 = por %p69, %p70
    %p72 = scmp.ne.s32.totalorder %s64, %s67
    %p73 = scmp.eq.s32.totalorder %s12, 0
    %p74 = por %p72, %p73
    %p75 = scmp.ne.s32.totalorder %s64, %s67
    %p76 = scmp.eq.s32.totalorder %s17, 1
    %p77 = por %p75, %p76
    %p78 = scmp.ne.s32.totalorder %s67, %s68
    %p79 = scmp.eq.s32.totalorder %s17, 0
    %p80 = por %p78, %p79
    %p81 = scmp.ne.s32.totalorder %s67, %s68
    %p82 = scmp.eq.s32.totalorder %s18, 1
    %p83 = por %p81, %p82
    %p85 = scmp.ne.s32.totalorder %s68, %s84
    %p86 = scmp.eq.s32.totalorder %s18, 0
    %p87 = por %p85, %p86
    %s89 = sadd.s32 %s88, 1
    %p92 = scmp.eq.s32.totalorder %s12, 1
    %p93 = scmp.ne.s32.totalorder %s88, %s90
    %p94 = scmp.eq.s32.totalorder %s12, 0
    %p95 = por %p93, %p94
    %p96 = scmp.ne.s32.totalorder %s88, %s90
    %p97 = scmp.eq.s32.totalorder %s17, 1
    %p98 = por %p96, %p97
    %p99 = scmp.ne.s32.totalorder %s90, %s91
    %p100 = scmp.eq.s32.totalorder %s17, 0
    %p101 = por %p99, %p100
    %p102 = scmp.ne.s32.totalorder %s90, %s91
    %p103 = scmp.eq.s32.totalorder %s18, 1
    %p104 = por %p102, %p103
    %p106 = scmp.ne.s32.totalorder %s91, %s105
    %p107 = scmp.eq.s32.totalorder %s18, 0
    %p108 = por %p106, %p107
    %s110 = sadd.s32 %s109, 1
    %p113 = scmp.eq.s32.totalorder %s12, 1
    %p114 = scmp.ne.s32.totalorder %s109, %s111
    %p115 = scmp.eq.s32.totalorder %s12, 0
    %p116 = por %p114, %p115
    %p117 = scmp.ne.s32.totalorder %s109, %s111
    %p118 = scmp.eq.s32.totalorder %s17, 1
    %p119 = por %p117, %p118
    %p120 = scmp.ne.s32.totalorder %s111, %s112
    %p121 = scmp.eq.s32.totalorder %s17, 0
    %p122 = por %p120, %p121
    %p123 = scmp.ne.s32.totalorder %s111, %s112
    %p124 = scmp.eq.s32.totalorder %s18, 1
    %p125 = por %p123, %p124
    %p127 = scmp.ne.s32.totalorder %s112, %s126
    %p128 = scmp.eq.s32.totalorder %s18, 0
    %p129 = por %p127, %p128
    %s130 = ssub.s32 %s19, %s31
    %s131 = ssub.s32 %s20, %s27
    %s132 = sor.u32 %s130, %s131
    %p133 = scmp.eq.s32.totalorder %s132, 0
    %s135 = sadd.s32 %s134, 1
    %s136 = scalar_select %p133, %s134, %s135
    %p139 = pneg %p133
    %p140 = scmp.eq.s32.totalorder %s12, 1
    %p141 = por %p139, %p140
    %p142 = scmp.ne.s32.totalorder %s134, %s137
    %p143 = scmp.eq.s32.totalorder %s12, 0
    %p144 = por %p142, %p143
    %p145 = scmp.ne.s32.totalorder %s134, %s137
    %p146 = scmp.eq.s32.totalorder %s17, 1
    %p147 = por %p145, %p146
    %p148 = scmp.ne.s32.totalorder %s137, %s138
    %p149 = scmp.eq.s32.totalorder %s17, 0
    %p150 = por %p148, %p149
    %p151 = scmp.ne.s32.totalorder %s137, %s138
    %p152 = scmp.eq.s32.totalorder %s18, 1
    %p153 = por %p151, %p152
    %p155 = scmp.ne.s32.totalorder %s138, %s154
    %p156 = scmp.eq.s32.totalorder %s18, 0
    %p157 = por %p155, %p156
    %s158 = ssub.s32 %s19, %s31
    %s159 = ssub.s32 %s20, %s27
    %s160 = sor.u32 %s158, %s159
    %p161 = scmp.eq.s32.totalorder %s160, 0
    %s163 = sadd.s32 %s162, 1
    %s164 = scalar_select %p161, %s162, %s163
    %p167 = pneg %p161
    %p168 = scmp.eq.s32.totalorder %s12, 1
    %p169 = por %p167, %p168
    %p170 = scmp.ne.s32.totalorder %s162, %s165
    %p171 = scmp.eq.s32.totalorder %s12, 0
    %p172 = por %p170, %p171
    %p173 = scmp.ne.s32.totalorder %s162, %s165
    %p174 = scmp.eq.s32.totalorder %s17, 1
    %p175 = por %p173, %p174
    %p176 = scmp.ne.s32.totalorder %s165, %s166
    %p177 = scmp.eq.s32.totalorder %s17, 0
    %p178 = por %p176, %p177
    %p179 = scmp.ne.s32.totalorder %s165, %s166
    %p180 = scmp.eq.s32.totalorder %s18, 1
    %p181 = por %p179, %p180
    %p183 = scmp.ne.s32.totalorder %s166, %s182
    %p184 = scmp.eq.s32.totalorder %s18, 0
    %p185 = por %p183, %p184
    %p186 = scmp.le.s32.totalorder 1, %s12
    %p187 = scmp.lt.s32.totalorder %s12, 3
    %p188 = pnand %p186, %p187
    %p189 = pneg %p188
    // Predicated region
    $region9: #{upsample.1} parent=5 // pred_check
      _
    $region10: #{upsample.1} parent=5 // pred_check_branch
      %191 = sbr.rel (%p188) target = $region12
    $region11: #{upsample.1} parent=5 // pred_region
      %s192 = ssub.s32 %s12, 1
      // Predicated region
      $region13: #{upsample.1} parent=11 // pred_check
        %p193 = pneg %p101
      $region14: #{upsample.1} parent=11 // pred_check_branch
        %195 = sbr.rel (%p193) target = $region16
      $region15: #{upsample.1} parent=11 // pred_region
        _
      $region16: #{upsample.1} parent=11 // pred_fallthru
        _
      // Predicated region
      $region17: #{upsample.1} parent=11 // pred_check
        %p196 = pneg %p122
      $region18: #{upsample.1} parent=11 // pred_check_branch
        %198 = sbr.rel (%p196) target = $region20
      $region19: #{upsample.1} parent=11 // pred_region
        _
      $region20: #{upsample.1} parent=11 // pred_fallthru
        _
    $region12: #{upsample.1} parent=5 // pred_fallthru
      _
    %p199 = scmp.lt.s32.totalorder %s12, 2
    // Predicated region
    $region21: #{upsample.1} parent=5 // pred_check
      %p200 = pneg %p199
    $region22: #{upsample.1} parent=5 // pred_check_branch
      %202 = sbr.rel (%p200) target = $region24
    $region23: #{upsample.1} parent=5 // pred_region
      // Predicated region
      $region25: #{upsample.1} parent=23 // pred_check
        %p203 = pneg %p46
      $region26: #{upsample.1} parent=23 // pred_check_branch
        %205 = sbr.rel (%p203) target = $region28
      $region27: #{upsample.1} parent=23 // pred_region
        %p206 = scmp.lt.s32.totalorder %s19, 1
        %s207 = scalar_select %p206, %s19, 1
        %p208 = scmp.lt.s32.totalorder %s20, 0
        %s209 = scalar_select %p208, %s20, 0
        %s210 = smul.addr %s209, 4
        %s211 = smul.addr %s207, 4
        %s212 = sadd.s32 %s210, %s211
        %s213 = smul.addr %s212, 8
        %s214 = scalar_lea.vmem %s0, %s213
      $region28: #{upsample.1} parent=23 // pred_fallthru
        _
      // Predicated region
      $region29: #{upsample.1} parent=23 // pred_check
        %p215 = pneg %p74
      $region30: #{upsample.1} parent=23 // pred_check_branch
        %217 = sbr.rel (%p215) target = $region32
      $region31: #{upsample.1} parent=23 // pred_region
        %p218 = scmp.lt.s32.totalorder %s19, 1
        %s219 = scalar_select %p218, %s19, 1
        %p220 = scmp.lt.s32.totalorder %s20, 0
        %s221 = scalar_select %p220, %s20, 0
        %s222 = smul.addr %s219, 4
        %s223 = sadd.s32 %s221, %s222
        %s224 = smul.addr %s223, 8
        %s225 = scalar_lea.vmem %s1, %s224
      $region32: #{upsample.1} parent=23 // pred_fallthru
        _
    $region24: #{upsample.1} parent=5 // pred_fallthru
      _
    %p226 = scmp.le.s32.totalorder 1, %s12
    %p227 = scmp.lt.s32.totalorder %s12, 3
    %p228 = pnand %p226, %p227
    %p229 = pneg %p228
    // Predicated region
    $region33: #{upsample.1} parent=5 // pred_check
      _
    $region34: #{upsample.1} parent=5 // pred_check_branch
      %231 = sbr.rel (%p228) target = $region36
    $region35: #{upsample.1} parent=5 // pred_region
      %s232 = ssub.s32 %s12, 1
      %p233 = scmp.lt.s32.totalorder %s21, 1
      %s234 = scalar_select %p233, %s21, 1
      %p235 = scmp.lt.s32.totalorder %s22, 0
      %s236 = scalar_select %p235, %s22, 0
      %s237 = smul.addr %s236, 4
      %s238 = smul.addr %s234, 4
      %s239 = sadd.s32 %s237, %s238
      %s240 = smul.addr %s239, 8
      %s241 = scalar_lea.vmem %s0, %s240
      %p242 = pneg %p52
      %p243 = pneg %p49
      %p244 = scmp.lt.s32.totalorder %s21, 1
      %s245 = scalar_select %p244, %s21, 1
      %p246 = scmp.lt.s32.totalorder %s22, 0
      %s247 = scalar_select %p246, %s22, 0
      %s248 = smul.addr %s245, 4
      %s249 = sadd.s32 %s247, %s248
      %s250 = smul.addr %s249, 8
      %s251 = scalar_lea.vmem %s1, %s250
      %p252 = pneg %p80
      %p253 = pneg %p77
      %p254 = pneg %p101
      %p255 = pneg %p98
      %p256 = pneg %p122
      %p257 = pneg %p119
      %p258 = pneg %p150
      %p259 = pneg %p147
      %p260 = scmp.lt.s32.totalorder %s21, 1
      %s261 = scalar_select %p260, %s21, 1
      %p262 = scmp.lt.s32.totalorder %s22, 0
      %s263 = scalar_select %p262, %s22, 0
      %s264 = smul.addr %s261, 4
      %s265 = sadd.s32 %s263, %s264
      %s266 = smul.addr %s265, 8
      %s267 = scalar_lea.vmem %s4, %s266
      %p268 = pneg %p178
      %p269 = pneg %p175
      %p270 = scmp.lt.s32.totalorder %s21, 1
      %s271 = scalar_select %p270, %s21, 1
      %p272 = scmp.lt.s32.totalorder %s22, 0
      %s273 = scalar_select %p272, %s22, 0
      %s274 = smul.addr %s271, 4
      %s275 = sadd.s32 %s273, %s274
      %s276 = smul.addr %s275, 8
      %s277 = scalar_lea.vmem %s5, %s276
      %p278 = scmp.lt.s32.totalorder %s21, 1
      %s279 = scalar_select %p278, %s21, 1
      %p280 = scmp.lt.s32.totalorder %s22, 0
      %s281 = scalar_select %p280, %s22, 0
      %s282 = smul.addr %s281, 4
      %s283 = smul.addr %s279, 4
      %s284 = sadd.s32 %s282, %s283
      %s285 = smul.addr %s284, 8
      %s286 = scalar_lea.vmem %s0, %s285
      %p287 = scmp.lt.s32.totalorder %s21, 1
      %s288 = scalar_select %p287, %s21, 1
      %p289 = scmp.lt.s32.totalorder %s22, 0
      %s290 = scalar_select %p289, %s22, 0
      %s291 = smul.addr %s288, 4
      %s292 = sadd.s32 %s290, %s291
      %s293 = smul.addr %s292, 8
      %s294 = scalar_lea.vmem %s1, %s293
      %p295 = scmp.lt.s32.totalorder %s21, 1
      %s296 = scalar_select %p295, %s21, 1
      %p297 = scmp.lt.s32.totalorder %s22, 0
      %s298 = scalar_select %p297, %s22, 0
      %s299 = smul.addr %s296, 4
      %s300 = sadd.s32 %s298, %s299
      %s301 = smul.addr %s300, 8
      %s302 = scalar_lea.vmem %s4, %s301
      %p303 = scmp.lt.s32.totalorder %s21, 1
      %s304 = scalar_select %p303, %s21, 1
      %p305 = scmp.lt.s32.totalorder %s22, 0
      %s306 = scalar_select %p305, %s22, 0
      %s307 = smul.addr %s304, 4
      %s308 = sadd.s32 %s306, %s307
      %s309 = smul.addr %s308, 8
      %s310 = scalar_lea.vmem %s5, %s309
      %v311 = vld [vmem:[%s2] sm:$0xff]
      %v312 = vld [vmem:[%s2 + $0x8] sm:$0xff]
      %v313 = vld [vmem:[%s2 + $0x10] sm:$0xff]
      %v314 = vld [vmem:[%s2 + $0x18] sm:$0xff]
      %v315 = vld [vmem:[%s2 + $0x20] sm:$0xff]
      %v316 = vld [vmem:[%s2 + $0x28] sm:$0xff]
      %v317 = vld [vmem:[%s2 + $0x30] sm:$0xff]
      %v318 = vld [vmem:[%s2 + $0x38] sm:$0xff]
      %v319 = vld [vmem:[%s2 + $0x40] sm:$0xff]
      %v320 = vld [vmem:[%s2 + $0x48] sm:$0xff]
      %v321 = vld [vmem:[%s2 + $0x50] sm:$0xff]
      %v322 = vld [vmem:[%s2 + $0x58] sm:$0xff]
      %v323 = vld [vmem:[%s2 + $0x60] sm:$0xff]
      %v324 = vld [vmem:[%s2 + $0x68] sm:$0xff]
      %v325 = vld [vmem:[%s2 + $0x70] sm:$0xff]
      %v326 = vld [vmem:[%s2 + $0x78] sm:$0xff]
      %v327 = vld [vmem:[%s294] sm:$0xff]
      %v328 = vld [vmem:[%s294 + $0x8] sm:$0xff]
      %v329 = vld [vmem:[%s294 + $0x10] sm:$0xff]
      %v330 = vld [vmem:[%s294 + $0x18] sm:$0xff]
      %vm331 = vcmask 261120
      %v333 = vsel %vm331, %v311, 0
      %v336 = vsel %vm331, %v312, 0
      %v339 = vsel %vm331, %v313, 0
      %v342 = vsel %vm331, %v314, 0
      %v345 = vsel %vm331, %v315, 0
      %v348 = vsel %vm331, %v316, 0
      %v351 = vsel %vm331, %v317, 0
      %v354 = vsel %vm331, %v318, 0
      %v357 = vsel %vm331, %v319, 0
      %v360 = vsel %vm331, %v320, 0
      %v363 = vsel %vm331, %v321, 0
      %v366 = vsel %vm331, %v322, 0
      %v369 = vsel %vm331, %v323, 0
      %v372 = vsel %vm331, %v324, 0
      %v375 = vsel %vm331, %v325, 0
      %v378 = vsel %vm331, %v326, 0
      %380 = vmatprep.subr.mxu0 0.0
      %381 = vmatpush1.msra.mxu0 %v327
      %382 = vmatprep.subr.mxu0 0.0
      %383 = vmatpush1.msra.mxu0 %v328
      %384 = vmatprep.subr.mxu0 0.0
      %385 = vmatpush1.msra.mxu0 %v329
      %386 = vmatprep.subr.mxu0 0.0
      %387 = vmatpush1.msra.mxu0 %v330
      %388 = vmatprep.subr.mxu0 0.0
      %389 = vmatpush1.msra.mxu0 0.0
      %390 = vmatprep.subr.mxu0 0.0
      %391 = vmatpush1.msra.mxu0 0.0
      %392 = vmatprep.subr.mxu0 0.0
      %393 = vmatpush1.msra.mxu0 0.0
      %394 = vmatprep.subr.mxu0 0.0
      %395 = vmatpush1.msra.mxu0 0.0
      %396 = vmatprep.subr.mxu0 0.0
      %397 = vmatpush1.msra.mxu0 0.0
      %398 = vmatprep.subr.mxu0 0.0
      %399 = vmatpush1.msra.mxu0 0.0
      %400 = vmatprep.subr.mxu0 0.0
      %401 = vmatpush1.msra.mxu0 0.0
      %402 = vmatprep.subr.mxu0 0.0
      %403 = vmatpush1.msra.mxu0 0.0
      %404 = vmatprep.subr.mxu0 0.0
      %405 = vmatpush1.msra.mxu0 0.0
      %406 = vmatprep.subr.mxu0 0.0
      %407 = vmatpush1.msra.mxu0 0.0
      %408 = vmatprep.subr.mxu0 0.0
      %409 = vmatpush1.msra.mxu0 0.0
      %410 = vmatprep.subr.mxu0 0.0
      %411 = vmatpush1.msra.mxu0 0.0
      %412 = vmatprep.subr.mxu0 0.0
      %413 = vmatpush1.msra.mxu0 0.0
      %414 = vmatprep.subr.mxu0 0.0
      %415 = vmatpush1.msra.mxu0 0.0
      %416 = vmatprep.subr.mxu0 0.0
      %417 = vmatpush1.msra.mxu0 0.0
      %418 = vmatprep.subr.mxu0 0.0
      %419 = vmatpush1.msra.mxu0 0.0
      %420 = vmatprep.subr.mxu0 0.0
      %421 = vmatpush1.msra.mxu0 0.0
      %422 = vmatprep.subr.mxu0 0.0
      %423 = vmatpush1.msra.mxu0 0.0
      %424 = vmatprep.subr.mxu0 0.0
      %425 = vmatpush1.msra.mxu0 0.0
      %426 = vmatprep.subr.mxu0 0.0
      %427 = vmatpush1.msra.mxu0 0.0
      %428 = vmatprep.subr.mxu0 0.0
      %429 = vmatpush1.msra.mxu0 0.0
      %430 = vmatprep.subr.mxu0 0.0
      %431 = vmatpush1.msra.mxu0 0.0
      %432 = vmatprep.subr.mxu0 0.0
      %433 = vmatpush1.msra.mxu0 0.0
      %434 = vmatprep.subr.mxu0 0.0
      %435 = vmatpush1.msra.mxu0 0.0
      %436 = vmatprep.subr.mxu0 0.0
      %437 = vmatpush1.msra.mxu0 0.0
      %438 = vmatprep.subr.mxu0 0.0
      %439 = vmatpush1.msra.mxu0 0.0
      %440 = vmatprep.subr.mxu0 0.0
      %441 = vmatpush1.msra.mxu0 0.0
      %442 = vmatprep.subr.mxu0 0.0
      %443 = vmatpush1.msra.mxu0 0.0
      %444 = vmatprep.mubr.f32.mxu0 0.0
      %445 = vmatmul.mubr.f32.gmra.mrb[0].mxu0 %v333
      %v446 = vpop.f32.mrb[0].mxu0
      %v447 = vadd.f32 0.0, %v446
      %v448 = vpop.f32.mrb[0].mxu0
      %449 = vmatprep.mubr.f32.mxu0 0.0
      %450 = vmatmul.mubr.f32.gmra.mrb[0].mxu0 %v336
      %v451 = vpop.f32.mrb[0].mxu0
      %v452 = vadd.f32 0.0, %v451
      %v453 = vpop.f32.mrb[0].mxu0
      %454 = vmatprep.mubr.f32.mxu0 0.0
      %455 = vmatmul.mubr.f32.gmra.mrb[0].mxu0 %v339
      %v456 = vpop.f32.mrb[0].mxu0
      %v457 = vadd.f32 0.0, %v456
      %v458 = vpop.f32.mrb[0].mxu0
      %459 = vmatprep.mubr.f32.mxu0 0.0
      %460 = vmatmul.mubr.f32.gmra.mrb[0].mxu0 %v342
      %v461 = vpop.f32.mrb[0].mxu0
      %v462 = vadd.f32 0.0, %v461
      %v463 = vpop.f32.mrb[0].mxu0
      %464 = vmatprep.mubr.f32.mxu0 0.0
      %465 = vmatmul.mubr.f32.gmra.mrb[0].mxu0 %v345
      %v466 = vpop.f32.mrb[0].mxu0
      %v467 = vadd.f32 0.0, %v466
      %v468 = vpop.f32.mrb[0].mxu0
      %469 = vmatprep.mubr.f32.mxu0 0.0
      %470 = vmatmul.mubr.f32.gmra.mrb[0].mxu0 %v348
      %v471 = vpop.f32.mrb[0].mxu0
      %v472 = vadd.f32 0.0, %v471
      %v473 = vpop.f32.mrb[0].mxu0
      %474 = vmatprep.mubr.f32.mxu0 0.0
      %475 = vmatmul.mubr.f32.gmra.mrb[0].mxu0 %v351
      %v476 = vpop.f32.mrb[0].mxu0
      %v477 = vadd.f32 0.0, %v476
      %v478 = vpop.f32.mrb[0].mxu0
      %479 = vmatprep.mubr.f32.mxu0 0.0
      %480 = vmatmul.mubr.f32.gmra.mrb[0].mxu0 %v354
      %v481 = vpop.f32.mrb[0].mxu0
      %v482 = vadd.f32 0.0, %v481
      %v483 = vpop.f32.mrb[0].mxu0
      %484 = vmatprep.mubr.f32.mxu0 0.0
      %485 = vmatmul.mubr.f32.gmra.mrb[0].mxu0 %v357
      %v486 = vpop.f32.mrb[0].mxu0
      %v487 = vadd.f32 0.0, %v486
      %v488 = vpop.f32.mrb[0].mxu0
      %489 = vmatprep.mubr.f32.mxu0 0.0
      %490 = vmatmul.mubr.f32.gmra.mrb[0].mxu0 %v360
      %v491 = vpop.f32.mrb[0].mxu0
      %v492 = vadd.f32 0.0, %v491
      %v493 = vpop.f32.mrb[0].mxu0
      %494 = vmatprep.mubr.f32.mxu0 0.0
      %495 = vmatmul.mubr.f32.gmra.mrb[0].mxu0 %v363
      %v496 = vpop.f32.mrb[0].mxu0
      %v497 = vadd.f32 0.0, %v496
      %v498 = vpop.f32.mrb[0].mxu0
      %499 = vmatprep.mubr.f32.mxu0 0.0
      %500 = vmatmul.mubr.f32.gmra.mrb[0].mxu0 %v366
      %v501 = vpop.f32.mrb[0].mxu0
      %v502 = vadd.f32 0.0, %v501
      %v503 = vpop.f32.mrb[0].mxu0
      %504 = vmatprep.mubr.f32.mxu0 0.0
      %505 = vmatmul.mubr.f32.gmra.mrb[0].mxu0 %v369
      %v506 = vpop.f32.mrb[0].mxu0
      %v507 = vadd.f32 0.0, %v506
      %v508 = vpop.f32.mrb[0].mxu0
      %509 = vmatprep.mubr.f32.mxu0 0.0
      %510 = vmatmul.mubr.f32.gmra.mrb[0].mxu0 %v372
      %v511 = vpop.f32.mrb[0].mxu0
      %v512 = vadd.f32 0.0, %v511
      %v513 = vpop.f32.mrb[0].mxu0
      %514 = vmatprep.mubr.f32.mxu0 0.0
      %515 = vmatmul.mubr.f32.gmra.mrb[0].mxu0 %v375
      %v516 = vpop.f32.mrb[0].mxu0
      %v517 = vadd.f32 0.0, %v516
      %v518 = vpop.f32.mrb[0].mxu0
      %519 = vmatprep.mubr.f32.mxu0 0.0
      %520 = vmatmul.mubr.f32.gmra.mrb[0].mxu0 %v378
      %v521 = vpop.f32.mrb[0].mxu0
      %v522 = vadd.f32 0.0, %v521
      %v523 = vpop.f32.mrb[0].mxu0
      %524 = vdwg.mxu0
      %v525 = vld [vmem:[%s286] sm:$0xff]
      %v526 = vld [vmem:[%s286 + $0x8] sm:$0xff]
      %v527 = vld [vmem:[%s286 + $0x10] sm:$0xff]
      %v528 = vld [vmem:[%s286 + $0x18] sm:$0xff]
      %529 = vmatprep.subr.mxu0 0.0
      %530 = vmatpush1.msra.mxu0 %v525
      %531 = vmatprep.subr.mxu0 0.0
      %532 = vmatpush1.msra.mxu0 %v526
      %533 = vmatprep.subr.mxu0 0.0
      %534 = vmatpush1.msra.mxu0 %v527
      %535 = vmatprep.subr.mxu0 0.0
      %536 = vmatpush1.msra.mxu0 %v528
      %537 = vmatprep.subr.mxu0 0.0
      %538 = vmatpush1.msra.mxu0 0.0
      %539 = vmatprep.subr.mxu0 0.0
      %540 = vmatpush1.msra.mxu0 0.0
      %541 = vmatprep.subr.mxu0 0.0
      %542 = vmatpush1.msra.mxu0 0.0
      %543 = vmatprep.subr.mxu0 0.0
      %544 = vmatpush1.msra.mxu0 0.0
      %545 = vmatprep.subr.mxu0 0.0
      %546 = vmatpush1.msra.mxu0 0.0
      %547 = vmatprep.subr.mxu0 0.0
      %548 = vmatpush1.msra.mxu0 0.0
      %549 = vmatprep.subr.mxu0 0.0
      %550 = vmatpush1.msra.mxu0 0.0
      %551 = vmatprep.subr.mxu0 0.0
      %552 = vmatpush1.msra.mxu0 0.0
      %553 = vmatprep.subr.mxu0 0.0
      %554 = vmatpush1.msra.mxu0 0.0
      %555 = vmatprep.subr.mxu0 0.0
      %556 = vmatpush1.msra.mxu0 0.0
      %557 = vmatprep.subr.mxu0 0.0
      %558 = vmatpush1.msra.mxu0 0.0
      %559 = vmatprep.subr.mxu0 0.0
      %560 = vmatpush1.msra.mxu0 0.0
      %561 = vmatprep.subr.mxu0 0.0
      %562 = vmatpush1.msra.mxu0 0.0
      %563 = vmatprep.subr.mxu0 0.0
      %564 = vmatpush1.msra.mxu0 0.0
      %565 = vmatprep.subr.mxu0 0.0
      %566 = vmatpush1.msra.mxu0 0.0
      %567 = vmatprep.subr.mxu0 0.0
      %568 = vmatpush1.msra.mxu0 0.0
      %569 = vmatprep.subr.mxu0 0.0
      %570 = vmatpush1.msra.mxu0 0.0
      %571 = vmatprep.subr.mxu0 0.0
      %572 = vmatpush1.msra.mxu0 0.0
      %573 = vmatprep.subr.mxu0 0.0
      %574 = vmatpush1.msra.mxu0 0.0
      %575 = vmatprep.subr.mxu0 0.0
      %576 = vmatpush1.msra.mxu0 0.0
      %577 = vmatprep.subr.mxu0 0.0
      %578 = vmatpush1.msra.mxu0 0.0
      %579 = vmatprep.subr.mxu0 0.0
      %580 = vmatpush1.msra.mxu0 0.0
      %581 = vmatprep.subr.mxu0 0.0
      %582 = vmatpush1.msra.mxu0 0.0
      %583 = vmatprep.subr.mxu0 0.0
      %584 = vmatpush1.msra.mxu0 0.0
      %585 = vmatprep.subr.mxu0 0.0
      %586 = vmatpush1.msra.mxu0 0.0
      %587 = vmatprep.subr.mxu0 0.0
      %588 = vmatpush1.msra.mxu0 0.0
      %589 = vmatprep.subr.mxu0 0.0
      %590 = vmatpush1.msra.mxu0 0.0
      %591 = vmatprep.subr.mxu0 0.0
      %592 = vmatpush1.msra.mxu0 0.0
      %593 = vmatprep.mubr.f32.mxu0 0.0
      %594 = vmatmul.mubr.f32.gmra.mrb[0].mxu0 %v333
      %v595 = vpop.f32.mrb[0].mxu0
      %v596 = vadd.f32 0.0, %v595
      %v597 = vpop.f32.mrb[0].mxu0
      %598 = vmatprep.mubr.f32.mxu0 0.0
      %599 = vmatmul.mubr.f32.gmra.mrb[0].mxu0 %v336
      %v600 = vpop.f32.mrb[0].mxu0
      %v601 = vadd.f32 0.0, %v600
      %v602 = vpop.f32.mrb[0].mxu0
      %603 = vmatprep.mubr.f32.mxu0 0.0
      %604 = vmatmul.mubr.f32.gmra.mrb[0].mxu0 %v339
      %v605 = vpop.f32.mrb[0].mxu0
      %v606 = vadd.f32 0.0, %v605
      %v607 = vpop.f32.mrb[0].mxu0
      %608 = vmatprep.mubr.f32.mxu0 0.0
      %609 = vmatmul.mubr.f32.gmra.mrb[0].mxu0 %v342
      %v610 = vpop.f32.mrb[0].mxu0
      %v611 = vadd.f32 0.0, %v610
      %v612 = vpop.f32.mrb[0].mxu0
      %613 = vmatprep.mubr.f32.mxu0 0.0
      %614 = vmatmul.mubr.f32.gmra.mrb[0].mxu0 %v345
      %v615 = vpop.f32.mrb[0].mxu0
      %v616 = vpop.f32.mrb[0].mxu0
      %617 = vmatprep.mubr.f32.mxu0 0.0
      %618 = vmatmul.mubr.f32.gmra.mrb[0].mxu0 %v348
      %v619 = vpop.f32.mrb[0].mxu0
      %v620 = vpop.f32.mrb[0].mxu0
      %621 = vmatprep.mubr.f32.mxu0 0.0
      %622 = vmatmul.mubr.f32.gmra.mrb[0].mxu0 %v351
      %v623 = vpop.f32.mrb[0].mxu0
      %v624 = vpop.f32.mrb[0].mxu0
      %625 = vmatprep.mubr.f32.mxu0 0.0
      %626 = vmatmul.mubr.f32.gmra.mrb[0].mxu0 %v354
      %v627 = vpop.f32.mrb[0].mxu0
      %v628 = vpop.f32.mrb[0].mxu0
      %629 = vmatprep.mubr.f32.mxu0 0.0
      %630 = vmatmul.mubr.f32.gmra.mrb[0].mxu0 %v357
      %v631 = vpop.f32.mrb[0].mxu0
      %v632 = vpop.f32.mrb[0].mxu0
      %633 = vmatprep.mubr.f32.mxu0 0.0
      %634 = vmatmul.mubr.f32.gmra.mrb[0].mxu0 %v360
      %v635 = vpop.f32.mrb[0].mxu0
      %v636 = vpop.f32.mrb[0].mxu0
      %637 = vmatprep.mubr.f32.mxu0 0.0
      %638 = vmatmul.mubr.f32.gmra.mrb[0].mxu0 %v363
      %v639 = vpop.f32.mrb[0].mxu0
      %v640 = vpop.f32.mrb[0].mxu0
      %641 = vmatprep.mubr.f32.mxu0 0.0
      %642 = vmatmul.mubr.f32.gmra.mrb[0].mxu0 %v366
      %v643 = vpop.f32.mrb[0].mxu0
      %v644 = vpop.f32.mrb[0].mxu0
      %645 = vmatprep.mubr.f32.mxu0 0.0
      %646 = vmatmul.mubr.f32.gmra.mrb[0].mxu0 %v369
      %v647 = vpop.f32.mrb[0].mxu0
      %v648 = vadd.f32 0.0, %v647
      %v649 = vpop.f32.mrb[0].mxu0
      %650 = vmatprep.mubr.f32.mxu0 0.0
      %651 = vmatmul.mubr.f32.gmra.mrb[0].mxu0 %v372
      %v652 = vpop.f32.mrb[0].mxu0
      %v653 = vadd.f32 0.0, %v652
      %v654 = vpop.f32.mrb[0].mxu0
      %655 = vmatprep.mubr.f32.mxu0 0.0
      %656 = vmatmul.mubr.f32.gmra.mrb[0].mxu0 %v375
      %v657 = vpop.f32.mrb[0].mxu0
      %v658 = vadd.f32 0.0, %v657
      %v659 = vpop.f32.mrb[0].mxu0
      %660 = vmatprep.mubr.f32.mxu0 0.0
      %661 = vmatmul.mubr.f32.gmra.mrb[0].mxu0 %v378
      %v662 = vpop.f32.mrb[0].mxu0
      %v663 = vadd.f32 0.0, %v662
      %v664 = vpop.f32.mrb[0].mxu0
      %665 = vdwg.mxu0
      %v666 = vld [vmem:[%s3] sm:$0xff]
      %v667 = vld [vmem:[%s3 + $0x8] sm:$0xff]
      %v668 = vld [vmem:[%s3 + $0x10] sm:$0xff]
      %v669 = vld [vmem:[%s3 + $0x18] sm:$0xff]
      %674 = vrot.lane.b32.xlu0 %v447, 1
      %v675 = vpop.permute.xlu0 %674
      %676 = vrot.lane.b32.xlu0 %v452, 1
      %v677 = vpop.permute.xlu0 %676
      %678 = vrot.lane.b32.xlu0 %v457, 1
      %v679 = vpop.permute.xlu0 %678
      %680 = vrot.lane.b32.xlu0 %v462, 1
      %v681 = vpop.permute.xlu0 %680
      %vm686 = vcmask 7168
      %v687 = vsel %vm686, %v596, %v675
      %v688 = vsel %vm686, %v601, %v677
      %v689 = vsel %vm686, %v606, %v679
      %v690 = vsel %vm686, %v611, %v681
      %v691 = vadd.f32 %v687, %v467
      %v692 = vadd.f32 %v688, %v472
      %v693 = vadd.f32 %v689, %v477
      %v694 = vadd.f32 %v690, %v482
      %696 = vset.pattern.permute.xlu0 0
      %697 = vperm.xlu0 %696, %v666
      %v698 = vpop.permute.xlu0 %697
      %701 = vset.pattern.permute.xlu0 0
      %702 = vperm.xlu0 %701, %v667
      %v703 = vpop.permute.xlu0 %702
      %706 = vset.pattern.permute.xlu0 0
      %707 = vperm.xlu0 %706, %v668
      %v708 = vpop.permute.xlu0 %707
      %711 = vset.pattern.permute.xlu0 0
      %712 = vperm.xlu0 %711, %v669
      %v713 = vpop.permute.xlu0 %712
      %v715 = vadd.f32 %v691, %v698
      %v716 = vadd.f32 %v692, %v703
      %v717 = vadd.f32 %v693, %v708
      %v718 = vadd.f32 %v694, %v713
      %723 = vrot.lane.b32.xlu0 %v507, 127
      %v724 = vpop.permute.xlu0 %723
      %725 = vrot.lane.b32.xlu0 %v512, 127
      %v726 = vpop.permute.xlu0 %725
      %727 = vrot.lane.b32.xlu0 %v517, 127
      %v728 = vpop.permute.xlu0 %727
      %729 = vrot.lane.b32.xlu0 %v522, 127
      %v730 = vpop.permute.xlu0 %729
      %739 = vrot.lane.b32.xlu0 %v648, 126
      %v740 = vpop.permute.xlu0 %739
      %741 = vrot.lane.b32.xlu0 %v653, 126
      %v742 = vpop.permute.xlu0 %741
      %743 = vrot.lane.b32.xlu0 %v658, 126
      %v744 = vpop.permute.xlu0 %743
      %745 = vrot.lane.b32.xlu0 %v663, 126
      %v746 = vpop.permute.xlu0 %745
      %vm751 = vcmask 1039360
      %v752 = vsel %vm751, %v724, %v740
      %v753 = vsel %vm751, %v726, %v742
      %v754 = vsel %vm751, %v728, %v744
      %v755 = vsel %vm751, %v730, %v746
      %v756 = vadd.f32 %v487, %v752
      %v757 = vadd.f32 %v492, %v753
      %v758 = vadd.f32 %v497, %v754
      %v759 = vadd.f32 %v502, %v755
      %v760 = vadd.f32 %v756, %v698
      %v761 = vadd.f32 %v757, %v703
      %v762 = vadd.f32 %v758, %v708
      %v763 = vadd.f32 %v759, %v713
      %764 = vst [vmem:[%s302] sm:$0xff] %v715
      %765 = vst [vmem:[%s302 + $0x8] sm:$0xff] %v716
      %766 = vst [vmem:[%s302 + $0x10] sm:$0xff] %v717
      %767 = vst [vmem:[%s302 + $0x18] sm:$0xff] %v718
      %768 = vst [vmem:[%s310] sm:$0xff] %v760
      %769 = vst [vmem:[%s310 + $0x8] sm:$0xff] %v761
      %770 = vst [vmem:[%s310 + $0x10] sm:$0xff] %v762
      %771 = vst [vmem:[%s310 + $0x18] sm:$0xff] %v763
      %p772 = scmp.lt.s32.totalorder %s21, 1
      %s773 = scalar_select %p772, %s21, 1
      %p774 = scmp.lt.s32.totalorder %s22, 0
      %s775 = scalar_select %p774, %s22, 0
      %s776 = smul.addr %s773, 4
      %s777 = sadd.s32 %s775, %s776
      %s778 = smul.addr %s777, 8
      %s779 = scalar_lea.vmem %s4, %s778
      %p780 = scmp.lt.s32.totalorder %s21, 1
      %s781 = scalar_select %p780, %s21, 1
      %p782 = scmp.lt.s32.totalorder %s22, 0
      %s783 = scalar_select %p782, %s22, 0
      %s784 = smul.addr %s781, 4
      %s785 = sadd.s32 %s783, %s784
      %s786 = smul.addr %s785, 8
      %s787 = scalar_lea.vmem %s5, %s786
      // Predicated region
      $region37: #{upsample.1} parent=35 // pred_check
        %p788 = pneg %p147
      $region38: #{upsample.1} parent=35 // pred_check_branch
        %790 = sbr.rel (%p788) target = $region40
      $region39: #{upsample.1} parent=35 // pred_region
        _
      $region40: #{upsample.1} parent=35 // pred_fallthru
        _
      // Predicated region
      $region41: #{upsample.1} parent=35 // pred_check
        %p791 = pneg %p175
      $region42: #{upsample.1} parent=35 // pred_check_branch
        %793 = sbr.rel (%p791) target = $region44
      $region43: #{upsample.1} parent=35 // pred_region
        _
      $region44: #{upsample.1} parent=35 // pred_fallthru
        _
    $region36: #{upsample.1} parent=5 // pred_fallthru
      _
    %p794 = scmp.le.s32.totalorder 2, %s12
    // Predicated region
    $region45: #{upsample.1} parent=5 // pred_check
      %p795 = pneg %p794
    $region46: #{upsample.1} parent=5 // pred_check_branch
      %797 = sbr.rel (%p795) target = $region48
    $region47: #{upsample.1} parent=5 // pred_region
      %s798 = ssub.s32 %s12, 2
      // Predicated region
      $region49: #{upsample.1} parent=47 // pred_check
        %p799 = pneg %p153
      $region50: #{upsample.1} parent=47 // pred_check_branch
        %801 = sbr.rel (%p799) target = $region52
      $region51: #{upsample.1} parent=47 // pred_region
        %p802 = scmp.lt.s32.totalorder %s23, 1
        %s803 = scalar_select %p802, %s23, 1
        %p804 = scmp.lt.s32.totalorder %s24, 0
        %s805 = scalar_select %p804, %s24, 0
        %s806 = smul.addr %s803, 4
        %s807 = sadd.s32 %s805, %s806
        %s808 = smul.addr %s807, 8
        %s809 = scalar_lea.vmem %s4, %s808
      $region52: #{upsample.1} parent=47 // pred_fallthru
        _
      // Predicated region
      $region53: #{upsample.1} parent=47 // pred_check
        %p810 = pneg %p181
      $region54: #{upsample.1} parent=47 // pred_check_branch
        %812 = sbr.rel (%p810) target = $region56
      $region55: #{upsample.1} parent=47 // pred_region
        %p813 = scmp.lt.s32.totalorder %s23, 1
        %s814 = scalar_select %p813, %s23, 1
        %p815 = scmp.lt.s32.totalorder %s24, 0
        %s816 = scalar_select %p815, %s24, 0
        %s817 = smul.addr %s814, 4
        %s818 = sadd.s32 %s816, %s817
        %s819 = smul.addr %s818, 8
        %s820 = scalar_lea.vmem %s5, %s819
      $region56: #{upsample.1} parent=47 // pred_fallthru
        _
    $region48: #{upsample.1} parent=5 // pred_fallthru
      _
  $region6: #{upsample.1} parent=0 // loop_footer
    %s16 = sadd.s32 1, %s12
  $region7: #{upsample.1} parent=0 // loop_footer_branch
    %11 = sbr.rel target = $region3
  $region8: #{upsample.1} parent=0 // loop_exit
    _

</llo_original>
